<compile_context>
chip_gen: v7x
topology: tpu7x:2x2x1
jax: 0.10.0
libtpu: 0.0.40
codegen_flags: <defaults>
</compile_context>

<pallas_src>
import functools

import jax
import jax.numpy as jnp
from jax.experimental import pallas as pl
from jax.experimental.pallas import tpu as pltpu


# ---------------------------------------------------------------------------
# Kernel
# ---------------------------------------------------------------------------
def _se_block_kernel(x_ref, w1t_ref, w2t_ref, w3t_ref, o_ref, *, inv_hw):
    # x_ref: (Bt, C, HW)   w1t: (C, Cr)   w2t: (Cr, Cr)   w3t: (Cr, C)
    xb = x_ref[...]                                             # I/O dtype

    # Squeeze: global average pool, accumulated in f32.
    pooled = jnp.sum(xb, axis=-1, dtype=jnp.float32) * inv_hw   # (Bt, C) f32

    # Excitation MLP, batched over the Bt rows (pre-transposed weights,
    # no width-1 matvecs, no in-kernel transposes).
    h1 = jnp.maximum(
        jnp.dot(pooled, w1t_ref[...], preferred_element_type=jnp.float32), 0.0
    )                                                           # (Bt, Cr)
    h2 = jnp.maximum(
        jnp.dot(h1, w2t_ref[...], preferred_element_type=jnp.float32), 0.0
    )                                                           # (Bt, Cr)
    gate = jax.nn.sigmoid(
        jnp.dot(h2, w3t_ref[...], preferred_element_type=jnp.float32)
    )                                                           # (Bt, C) f32

    # Scale: one multiply per element, no full-tile f32 materialization of x.
    o_ref[...] = xb * gate.astype(o_ref.dtype)[:, :, None]


# ---------------------------------------------------------------------------
# Chip-aware block budgeting
# ---------------------------------------------------------------------------
def _tpu_budget():
    """Return (vmem_capacity_bytes, num_tensorcores_per_device) best-effort."""
    vmem_cap = 128 << 20           # v5e / v6e default
    num_tc = 1
    try:
        info = pltpu.get_tpu_info()
        vmem_cap = int(getattr(info, "vmem_capacity_bytes", vmem_cap))
        # v7x exposes 64 MiB VMEM per TensorCore and has 2 TCs per chip.
        if vmem_cap <= (64 << 20):
            num_tc = 2
    except Exception:              # not on TPU / API unavailable
        pass
    return vmem_cap, num_tc


def _choose_bt(batch, per_batch_bytes, *, target_bytes, max_block_bytes, num_tc):
    """How many batch rows to fold per block (~target_bytes, VMEM-capped)."""
    bt = max(1, min(batch, target_bytes // max(1, per_batch_bytes)))
    bt = max(1, min(bt, max_block_bytes // max(1, per_batch_bytes)))
    if num_tc >= 2:
        # Keep >= 2 pipelined steps per TensorCore when the batch allows it,
        # so each TC gets prefetch/writeback overlap.
        if batch >= 4 * num_tc:
            bt = min(bt, max(1, batch // (2 * num_tc)))
        elif batch >= num_tc:
            bt = min(bt, max(1, batch // num_tc))
    return max(1, bt)


# ---------------------------------------------------------------------------
# Wrapper
# ---------------------------------------------------------------------------
@jax.jit
def se_block(x_nchw, w1, w2, w3):
    """x_nchw: (B, C, H, W); w1: (C//r, C); w2: (C//r, C//r); w3: (C, C//r)."""
    B, C, H, W = x_nchw.shape
    HW = H * W
    Cr = w1.shape[0]
    itemsize = x_nchw.dtype.itemsize

    # Flat (B, C, HW) view; no padding, no extra HBM passes.
    x_flat = x_nchw.reshape(B, C, HW)
    # Pre-transpose weights so the kernel runs (Bt,C)@(C,Cr) etc. directly.
    w1t, w2t, w3t = w1.T, w2.T, w3.T
    weight_bytes = (C * Cr + Cr * Cr + Cr * C) * w1.dtype.itemsize

    vmem_cap, num_tc = _tpu_budget()
    per_batch_bytes = C * HW * itemsize
    # Budget: input + output blocks, each double-buffered (4x block), plus
    # weights and a little headroom, must stay well under physical VMEM.
    max_block_bytes = max(
        per_batch_bytes,
        (int(0.8 * vmem_cap) - 2 * weight_bytes - (2 << 20)) // 4,
    )
    # TODO(synk): when even a single batch row exceeds max_block_bytes
    # (e.g. C=64, 224x224 f32 on v7x), fall back to an HW-tiled two-phase
    # path (accumulate pooled sums over HW tiles, then a second scaling pass).
    bt = _choose_bt(
        B,
        per_batch_bytes,
        target_bytes=4 << 20,
        max_block_bytes=max_block_bytes,
        num_tc=num_tc,
    )
    grid = (pl.cdiv(B, bt),)

    block_bytes = bt * per_batch_bytes
    vmem_limit = int(
        min(
            max(4 * block_bytes + 2 * weight_bytes + (2 << 20), 32 << 20),
            int(0.9 * vmem_cap),
        )
    )

    mlp_flops = 2 * B * (C * Cr + Cr * Cr + Cr * C)
    cost = pl.CostEstimate(
        flops=int(2 * B * C * HW + mlp_flops),
        transcendentals=int(B * C),
        bytes_accessed=int(2 * B * C * HW * itemsize + weight_bytes),
    )

    kernel = functools.partial(_se_block_kernel, inv_hw=1.0 / HW)

    out = pl.pallas_call(
        kernel,
        out_shape=jax.ShapeDtypeStruct((B, C, HW), x_nchw.dtype),
        grid_spec=pltpu.PrefetchScalarGridSpec(
            num_scalar_prefetch=0,
            grid=grid,
            in_specs=[
                # Trailing dims are the FULL array dims (C, HW), so the
                # (8,128) divisibility rule does not apply; Mosaic masks the
                # ragged lane tail inside the kernel.
                pl.BlockSpec((bt, C, HW), lambda b: (b, 0, 0)),
                pl.BlockSpec((C, Cr), lambda b: (0, 0)),
                pl.BlockSpec((Cr, Cr), lambda b: (0, 0)),
                pl.BlockSpec((Cr, C), lambda b: (0, 0)),
            ],
            out_specs=pl.BlockSpec((bt, C, HW), lambda b: (b, 0, 0)),
        ),
        compiler_params=pltpu.CompilerParams(
            dimension_semantics=("parallel",),
            vmem_limit_bytes=vmem_limit,
        ),
        cost_estimate=cost,
    )(x_flat, w1t, w2t, w3t)

    return out.reshape(B, C, H, W)


# ---------------------------------------------------------------------------
# Pure-JAX reference (mirrors the PyTorch module)
# ---------------------------------------------------------------------------
def se_block_ref(x, w1, w2, w3):
    y = jnp.mean(x, axis=(2, 3))                               # (B, C)
    y = jnp.maximum(y @ w1.T, 0.0)
    y = jnp.maximum(y @ w2.T, 0.0)
    y = jax.nn.sigmoid(y @ w3.T)                               # (B, C)
    return x * y[:, :, None, None]


if __name__ == "__main__":
    # Small shapes consistent with the module: c=16, r=8 -> hidden = 2.
    B, C, H, W = 2, 16, 8, 8
    r = 8
    Cr = C // r

    key = jax.random.PRNGKey(0)
    kx, k1, k2, k3 = jax.random.split(key, 4)

    x = jax.random.normal(kx, (B, C, H, W), dtype=jnp.float32)
    # PyTorch Linear weight shapes: (out_features, in_features), bias=False.
    w1 = jax.random.normal(k1, (Cr, C), dtype=jnp.float32) * 0.2
    w2 = jax.random.normal(k2, (Cr, Cr), dtype=jnp.float32) * 0.2
    w3 = jax.random.normal(k3, (C, Cr), dtype=jnp.float32) * 0.2

    out = jax.block_until_ready(se_block(x, w1, w2, w3))
    ref = jax.block_until_ready(se_block_ref(x, w1, w2, w3))

    assert out.shape == x.shape and out.dtype == x.dtype
    assert jnp.allclose(out, ref, atol=1e-5, rtol=1e-5)
    print("KERNEL_OK")
</pallas_src>

<mosaic_0001>
module attributes {stable_mosaic.version = 11 : i64} {
  func.func @_se_block_kernel(%arg0: i32, %arg1: memref<2x16x64xf32, #tpu.memory_space<vmem>>, %arg2: memref<16x2xf32, #tpu.memory_space<vmem>>, %arg3: memref<2x2xf32, #tpu.memory_space<vmem>>, %arg4: memref<2x16xf32, #tpu.memory_space<vmem>>, %arg5: memref<2x16x64xf32, #tpu.memory_space<vmem>>) attributes {dimension_semantics = [#tpu.dimension_semantics<parallel>], iteration_bounds = array<i64: 1>, scalar_prefetch = 0 : i64, scratch_operands = 0 : i64, tpu.core_type = #tpu.core_type<tc>, window_params = [{transform_indices = @transform_0, window_bounds = array<i64: 2, 16, 64>}, {pipeline_mode = #tpu.pipeline_mode<synchronous>, transform_indices = @transform_1, window_bounds = array<i64: 16, 2>}, {pipeline_mode = #tpu.pipeline_mode<synchronous>, transform_indices = @transform_2, window_bounds = array<i64: 2, 2>}, {pipeline_mode = #tpu.pipeline_mode<synchronous>, transform_indices = @transform_3, window_bounds = array<i64: 2, 16>}, {transform_indices = @transform_4, window_bounds = array<i64: 2, 16, 64>}]} {
    %c0 = arith.constant 0 : index
    %c0_0 = arith.constant 0 : index
    %c0_1 = arith.constant 0 : index
    %0 = vector.load %arg1[%c0, %c0_0, %c0_1] : memref<2x16x64xf32, #tpu.memory_space<vmem>>, vector<2x16x64xf32>
    %cst = arith.constant dense<0.000000e+00> : vector<2x16xf32>
    %1 = vector.multi_reduction <add>, %0, %cst [2] : vector<2x16x64xf32> to vector<2x16xf32>
    %cst_2 = arith.constant 1.562500e-02 : f32
    %2 = vector.broadcast %cst_2 : f32 to vector<2x16xf32>
    %3 = arith.mulf %1, %2 : vector<2x16xf32>
    %c0_3 = arith.constant 0 : index
    %c0_4 = arith.constant 0 : index
    %4 = vector.load %arg2[%c0_3, %c0_4] : memref<16x2xf32, #tpu.memory_space<vmem>>, vector<16x2xf32>
    %cst_5 = arith.constant dense<0.000000e+00> : vector<2x2xf32>
    %5 = tpu.matmul %3, %4, %cst_5 {dimension_numbers = #tpu.dot_dimension_numbers<[1], [0], [0], [1], [0, 0, 1, 1], [], []>} : vector<2x16xf32>, vector<16x2xf32>, vector<2x2xf32> -> vector<2x2xf32>
    %cst_6 = arith.constant 0.000000e+00 : f32
    %6 = vector.broadcast %cst_6 : f32 to vector<2x2xf32>
    %7 = arith.maximumf %5, %6 : vector<2x2xf32>
    %c0_7 = arith.constant 0 : index
    %c0_8 = arith.constant 0 : index
    %8 = vector.load %arg3[%c0_7, %c0_8] : memref<2x2xf32, #tpu.memory_space<vmem>>, vector<2x2xf32>
    %cst_9 = arith.constant dense<0.000000e+00> : vector<2x2xf32>
    %9 = tpu.matmul %7, %8, %cst_9 {dimension_numbers = #tpu.dot_dimension_numbers<[1], [0], [0], [1], [0, 0, 1, 1], [], []>} : vector<2x2xf32>, vector<2x2xf32>, vector<2x2xf32> -> vector<2x2xf32>
    %cst_10 = arith.constant 0.000000e+00 : f32
    %10 = vector.broadcast %cst_10 : f32 to vector<2x2xf32>
    %11 = arith.maximumf %9, %10 : vector<2x2xf32>
    %c0_11 = arith.constant 0 : index
    %c0_12 = arith.constant 0 : index
    %12 = vector.load %arg4[%c0_11, %c0_12] : memref<2x16xf32, #tpu.memory_space<vmem>>, vector<2x16xf32>
    %cst_13 = arith.constant dense<0.000000e+00> : vector<2x16xf32>
    %13 = tpu.matmul %11, %12, %cst_13 {dimension_numbers = #tpu.dot_dimension_numbers<[1], [0], [0], [1], [0, 0, 1, 1], [], []>} : vector<2x2xf32>, vector<2x16xf32>, vector<2x16xf32> -> vector<2x16xf32>
    %14 = arith.negf %13 : vector<2x16xf32>
    %15 = math.exp %14 : vector<2x16xf32>
    %cst_14 = arith.constant 1.000000e+00 : f32
    %16 = vector.broadcast %cst_14 : f32 to vector<2x16xf32>
    %17 = arith.addf %16, %15 : vector<2x16xf32>
    %18 = arith.divf %16, %17 : vector<2x16xf32>
    %19 = vector.shape_cast %18 : vector<2x16xf32> to vector<2x16x1xf32>
    %20 = vector.broadcast %19 : vector<2x16x1xf32> to vector<2x16x64xf32>
    %21 = arith.mulf %0, %20 : vector<2x16x64xf32>
    %c0_15 = arith.constant 0 : index
    %c0_16 = arith.constant 0 : index
    %c0_17 = arith.constant 0 : index
    %22 = vector.load %arg5[%c0_15, %c0_16, %c0_17] : memref<2x16x64xf32, #tpu.memory_space<vmem>>, vector<2x16x64xf32>
    tpu.vector_store %arg5[%c0_15, %c0_16, %c0_17], %21 {strides = array<i32>} : memref<2x16x64xf32, #tpu.memory_space<vmem>>, vector<2x16x64xf32>,
    return
  }
  func.func @transform_0(%arg0: i32) -> (i32, i32, i32) {
    %c0_i32 = arith.constant 0 : i32
    %c0_i32_0 = arith.constant 0 : i32
    %c0_i32_1 = arith.constant 0 : i32
    return %arg0, %c0_i32, %c0_i32_0 : i32, i32, i32
  }
  func.func @transform_1(%arg0: i32) -> (i32, i32) {
    %c0_i32 = arith.constant 0 : i32
    %c0_i32_0 = arith.constant 0 : i32
    %c0_i32_1 = arith.constant 0 : i32
    return %c0_i32, %c0_i32_0 : i32, i32
  }
  func.func @transform_2(%arg0: i32) -> (i32, i32) {
    %c0_i32 = arith.constant 0 : i32
    %c0_i32_0 = arith.constant 0 : i32
    %c0_i32_1 = arith.constant 0 : i32
    return %c0_i32, %c0_i32_0 : i32, i32
  }
  func.func @transform_3(%arg0: i32) -> (i32, i32) {
    %c0_i32 = arith.constant 0 : i32
    %c0_i32_0 = arith.constant 0 : i32
    %c0_i32_1 = arith.constant 0 : i32
    return %c0_i32, %c0_i32_0 : i32, i32
  }
  func.func @transform_4(%arg0: i32) -> (i32, i32, i32) {
    %c0_i32 = arith.constant 0 : i32
    %c0_i32_0 = arith.constant 0 : i32
    %c0_i32_1 = arith.constant 0 : i32
    return %arg0, %c0_i32, %c0_i32_0 : i32, i32, i32
  }
}

</mosaic_0001>

<llo_original>
// kernel: se_block.1
$region0: #{se_block.1}
  #allocation0 [shape = 'u32[]', space=smem, size = 0x4, offset = 0x4, fixed_abs, tag = 'smem constant byte address 0x4 - core index']
  #allocation1 [shape = 'u32[144,128]{1,0:T(1,128)}', space=vmem, size = 0x12000, scoped, tag = 'internal scratch']
  %s0 = inlined_call_operand.vmem [shape: f32[2,16,64], index: 0, kind: input, shape index: {}]
  %s1 = inlined_call_operand.vmem [shape: f32[16,2], index: 1, kind: input, shape index: {}]
  %s2 = inlined_call_operand.vmem [shape: f32[2,2], index: 2, kind: input, shape index: {}]
  %s3 = inlined_call_operand.vmem [shape: f32[2,16], index: 3, kind: input, shape index: {}]
  %s4 = inlined_call_operand.vmem [shape: f32[2,16,64], index: 4, kind: output, shape index: {}]
  %s5 = sld [smem:[#allocation0]]
  $region26: #{se_block.1} parent=0
    _
  %s7 = ssub.s32 1, %s5
  %s8 = scalar_select 0, %s7, %s5
  // Predicated region
  $region2: #{se_block.1} parent=0 // pred_check
    _
  $region3: #{se_block.1} parent=0 // pred_check_branch
    %10 = sbr.rel (0) target = $region5
  $region4: #{se_block.1} parent=0 // pred_region
    _
  $region5: #{se_block.1} parent=0 // pred_fallthru
    _
  // Predicated region
  $region6: #{se_block.1} parent=0 // pred_check
    _
  $region7: #{se_block.1} parent=0 // pred_check_branch
    %12 = sbr.rel (0) target = $region9
  $region8: #{se_block.1} parent=0 // pred_region
    _
  $region9: #{se_block.1} parent=0 // pred_fallthru
    _
  // Predicated region
  $region10: #{se_block.1} parent=0 // pred_check
    _
  $region11: #{se_block.1} parent=0 // pred_check_branch
    %14 = sbr.rel (0) target = $region13
  $region12: #{se_block.1} parent=0 // pred_region
    _
  $region13: #{se_block.1} parent=0 // pred_fallthru
    _
  // Predicated region
  $region14: #{se_block.1} parent=0 // pred_check
    _
  $region15: #{se_block.1} parent=0 // pred_check_branch
    %16 = sbr.rel (0) target = $region17
  $region16: #{se_block.1} parent=0 // pred_region
    _
  $region17: #{se_block.1} parent=0 // pred_fallthru
    _
  %v17 = vld [vmem:[%s0] sm:$0xff]
  %v18 = vld [vmem:[%s0 + $0x8] sm:$0xff]
  %v19 = vld [vmem:[%s0 + $0x10] sm:$0xff]
  %v20 = vld [vmem:[%s0 + $0x18] sm:$0xff]
  %vm21 = vcmask 523264
  %v22 = vsel %vm21, %v17, 0.0
  %23 = vadd.xlane.f32.xlu0 %v22
  %v24 = vpop.xlane.xlu0 %23
  %v25 = vsel %vm21, %v18, 0.0
  %26 = vadd.xlane.f32.xlu0 %v25
  %v27 = vpop.xlane.xlu0 %26
  %v28 = vsel %vm21, %v19, 0.0
  %29 = vadd.xlane.f32.xlu0 %v28
  %v30 = vpop.xlane.xlu0 %29
  %v31 = vsel %vm21, %v20, 0.0
  %32 = vadd.xlane.f32.xlu0 %v31
  %v33 = vpop.xlane.xlu0 %32
  %v34 = vmul.f32 %v24, 0.015625
  %v35 = vmul.f32 %v27, 0.015625
  %v36 = vmul.f32 %v30, 0.015625
  %v37 = vmul.f32 %v33, 0.015625
  %v38 = vld [vmem:[%s1] sm:$0xff]
  %v39 = vld [vmem:[%s1 + $0x8] sm:$0xff]
  %v44 = vlaneseq
  %v45 = vand.u32 %v44, 127
  %v46 = vlaneseq
  %v47 = vshrl.u32 %v46, 7
  %v48 = vsub.s32 %v45, %v47
  %v49 = vrot.slane %v34, %v48
  %v50 = vadd.s32 %v45, 4294967288
  %v51 = vlaneseq
  %v52 = vshrl.u32 %v51, 7
  %v53 = vsub.s32 %v50, %v52
  %v54 = vrot.slane %v35, %v53
  %vm55 = vcmask 130112
  %v56 = vsel %vm55, %v54, %v49
  %v57 = vlaneseq
  %v58 = vshrl.u32 %v57, 7
  %v59 = vsub.s32 %v45, %v58
  %v60 = vrot.slane %v36, %v59
  %v61 = vlaneseq
  %v62 = vshrl.u32 %v61, 7
  %v63 = vsub.s32 %v50, %v62
  %v64 = vrot.slane %v37, %v63
  %v65 = vsel %vm55, %v64, %v60
  %vm66 = vcmask 1041409
  %v67 = vsel %vm66, %v65, %v56
  %vm68 = vcmask 130048
  %v69 = vsel %vm68, %v67, 0
  %71 = vmatprep.subr.mxu0 0.0
  %72 = vmatpush1.msra.mxu0 %v38
  %73 = vmatprep.subr.mxu0 0.0
  %74 = vmatpush1.msra.mxu0 %v39
  %75 = vmatprep.subr.mxu0 0.0
  %76 = vmatpush1.msra.mxu0 0.0
  %77 = vmatprep.subr.mxu0 0.0
  %78 = vmatpush1.msra.mxu0 0.0
  %79 = vmatprep.subr.mxu0 0.0
  %80 = vmatpush1.msra.mxu0 0.0
  %81 = vmatprep.subr.mxu0 0.0
  %82 = vmatpush1.msra.mxu0 0.0
  %83 = vmatprep.subr.mxu0 0.0
  %84 = vmatpush1.msra.mxu0 0.0
  %85 = vmatprep.subr.mxu0 0.0
  %86 = vmatpush1.msra.mxu0 0.0
  %87 = vmatprep.subr.mxu0 0.0
  %88 = vmatpush1.msra.mxu0 0.0
  %89 = vmatprep.subr.mxu0 0.0
  %90 = vmatpush1.msra.mxu0 0.0
  %91 = vmatprep.subr.mxu0 0.0
  %92 = vmatpush1.msra.mxu0 0.0
  %93 = vmatprep.subr.mxu0 0.0
  %94 = vmatpush1.msra.mxu0 0.0
  %95 = vmatprep.subr.mxu0 0.0
  %96 = vmatpush1.msra.mxu0 0.0
  %97 = vmatprep.subr.mxu0 0.0
  %98 = vmatpush1.msra.mxu0 0.0
  %99 = vmatprep.subr.mxu0 0.0
  %100 = vmatpush1.msra.mxu0 0.0
  %101 = vmatprep.subr.mxu0 0.0
  %102 = vmatpush1.msra.mxu0 0.0
  %103 = vmatprep.subr.mxu0 0.0
  %104 = vmatpush1.msra.mxu0 0.0
  %105 = vmatprep.subr.mxu0 0.0
  %106 = vmatpush1.msra.mxu0 0.0
  %107 = vmatprep.subr.mxu0 0.0
  %108 = vmatpush1.msra.mxu0 0.0
  %109 = vmatprep.subr.mxu0 0.0
  %110 = vmatpush1.msra.mxu0 0.0
  %111 = vmatprep.subr.mxu0 0.0
  %112 = vmatpush1.msra.mxu0 0.0
  %113 = vmatprep.subr.mxu0 0.0
  %114 = vmatpush1.msra.mxu0 0.0
  %115 = vmatprep.subr.mxu0 0.0
  %116 = vmatpush1.msra.mxu0 0.0
  %117 = vmatprep.subr.mxu0 0.0
  %118 = vmatpush1.msra.mxu0 0.0
  %119 = vmatprep.subr.mxu0 0.0
  %120 = vmatpush1.msra.mxu0 0.0
  %121 = vmatprep.subr.mxu0 0.0
  %122 = vmatpush1.msra.mxu0 0.0
  %123 = vmatprep.subr.mxu0 0.0
  %124 = vmatpush1.msra.mxu0 0.0
  %125 = vmatprep.subr.mxu0 0.0
  %126 = vmatpush1.msra.mxu0 0.0
  %127 = vmatprep.subr.mxu0 0.0
  %128 = vmatpush1.msra.mxu0 0.0
  %129 = vmatprep.subr.mxu0 0.0
  %130 = vmatpush1.msra.mxu0 0.0
  %131 = vmatprep.subr.mxu0 0.0
  %132 = vmatpush1.msra.mxu0 0.0
  %133 = vmatprep.subr.mxu0 0.0
  %134 = vmatpush1.msra.mxu0 0.0
  %135 = vmatprep.mubr.f32.mxu0 0.0
  %136 = vmatmul.mubr.f32.gmra.mrb[0].mxu0 %v69
  %v137 = vpop.f32.mrb[0].mxu0
  %v138 = vadd.f32 0.0, %v137
  %v139 = vpop.f32.mrb[0].mxu0
  %140 = vdwg.mxu0
  %v141 = vmax.f32 %v138, 0.0
  %v142 = vld [vmem:[%s2] sm:$0x3]
  %vm143 = vcmask 15360
  %v145 = vsel %vm143, %v141, 0
  %vm147 = vcmask 1041408
  %v149 = vsel %vm147, %v142, 0
  %151 = vmatprep.subr.mxu0 0.0
  %152 = vmatpush1.msra.mxu0 %v149
  %153 = vmatprep.subr.mxu0 0.0
  %154 = vmatpush1.msra.mxu0 0.0
  %155 = vmatprep.subr.mxu0 0.0
  %156 = vmatpush1.msra.mxu0 0.0
  %157 = vmatprep.subr.mxu0 0.0
  %158 = vmatpush1.msra.mxu0 0.0
  %159 = vmatprep.subr.mxu0 0.0
  %160 = vmatpush1.msra.mxu0 0.0
  %161 = vmatprep.subr.mxu0 0.0
  %162 = vmatpush1.msra.mxu0 0.0
  %163 = vmatprep.subr.mxu0 0.0
  %164 = vmatpush1.msra.mxu0 0.0
  %165 = vmatprep.subr.mxu0 0.0
  %166 = vmatpush1.msra.mxu0 0.0
  %167 = vmatprep.subr.mxu0 0.0
  %168 = vmatpush1.msra.mxu0 0.0
  %169 = vmatprep.subr.mxu0 0.0
  %170 = vmatpush1.msra.mxu0 0.0
  %171 = vmatprep.subr.mxu0 0.0
  %172 = vmatpush1.msra.mxu0 0.0
  %173 = vmatprep.subr.mxu0 0.0
  %174 = vmatpush1.msra.mxu0 0.0
  %175 = vmatprep.subr.mxu0 0.0
  %176 = vmatpush1.msra.mxu0 0.0
  %177 = vmatprep.subr.mxu0 0.0
  %178 = vmatpush1.msra.mxu0 0.0
  %179 = vmatprep.subr.mxu0 0.0
  %180 = vmatpush1.msra.mxu0 0.0
  %181 = vmatprep.subr.mxu0 0.0
  %182 = vmatpush1.msra.mxu0 0.0
  %183 = vmatprep.subr.mxu0 0.0
  %184 = vmatpush1.msra.mxu0 0.0
  %185 = vmatprep.subr.mxu0 0.0
  %186 = vmatpush1.msra.mxu0 0.0
  %187 = vmatprep.subr.mxu0 0.0
  %188 = vmatpush1.msra.mxu0 0.0
  %189 = vmatprep.subr.mxu0 0.0
  %190 = vmatpush1.msra.mxu0 0.0
  %191 = vmatprep.subr.mxu0 0.0
  %192 = vmatpush1.msra.mxu0 0.0
  %193 = vmatprep.subr.mxu0 0.0
  %194 = vmatpush1.msra.mxu0 0.0
  %195 = vmatprep.subr.mxu0 0.0
  %196 = vmatpush1.msra.mxu0 0.0
  %197 = vmatprep.subr.mxu0 0.0
  %198 = vmatpush1.msra.mxu0 0.0
  %199 = vmatprep.subr.mxu0 0.0
  %200 = vmatpush1.msra.mxu0 0.0
  %201 = vmatprep.subr.mxu0 0.0
  %202 = vmatpush1.msra.mxu0 0.0
  %203 = vmatprep.subr.mxu0 0.0
  %204 = vmatpush1.msra.mxu0 0.0
  %205 = vmatprep.subr.mxu0 0.0
  %206 = vmatpush1.msra.mxu0 0.0
  %207 = vmatprep.subr.mxu0 0.0
  %208 = vmatpush1.msra.mxu0 0.0
  %209 = vmatprep.subr.mxu0 0.0
  %210 = vmatpush1.msra.mxu0 0.0
  %211 = vmatprep.subr.mxu0 0.0
  %212 = vmatpush1.msra.mxu0 0.0
  %213 = vmatprep.subr.mxu0 0.0
  %214 = vmatpush1.msra.mxu0 0.0
  %215 = vmatprep.mubr.f32.mxu0 0.0
  %216 = vmatmul.mubr.f32.gmra.mrb[0].mxu0 %v145
  %v217 = vpop.f32.mrb[0].mxu0
  %v218 = vadd.f32 0.0, %v217
  %v219 = vpop.f32.mrb[0].mxu0
  %220 = vdwg.mxu0
  %v221 = vmax.f32 %v218, 0.0
  %v222 = vld [vmem:[%s3] sm:$0x3]
  %v224 = vsel %vm143, %v221, 0
  %v227 = vsel %vm147, %v222, 0
  %229 = vmatprep.subr.mxu0 0.0
  %230 = vmatpush1.msra.mxu0 %v227
  %231 = vmatprep.subr.mxu0 0.0
  %232 = vmatpush1.msra.mxu0 0.0
  %233 = vmatprep.subr.mxu0 0.0
  %234 = vmatpush1.msra.mxu0 0.0
  %235 = vmatprep.subr.mxu0 0.0
  %236 = vmatpush1.msra.mxu0 0.0
  %237 = vmatprep.subr.mxu0 0.0
  %238 = vmatpush1.msra.mxu0 0.0
  %239 = vmatprep.subr.mxu0 0.0
  %240 = vmatpush1.msra.mxu0 0.0
  %241 = vmatprep.subr.mxu0 0.0
  %242 = vmatpush1.msra.mxu0 0.0
  %243 = vmatprep.subr.mxu0 0.0
  %244 = vmatpush1.msra.mxu0 0.0
  %245 = vmatprep.subr.mxu0 0.0
  %246 = vmatpush1.msra.mxu0 0.0
  %247 = vmatprep.subr.mxu0 0.0
  %248 = vmatpush1.msra.mxu0 0.0
  %249 = vmatprep.subr.mxu0 0.0
  %250 = vmatpush1.msra.mxu0 0.0
  %251 = vmatprep.subr.mxu0 0.0
  %252 = vmatpush1.msra.mxu0 0.0
  %253 = vmatprep.subr.mxu0 0.0
  %254 = vmatpush1.msra.mxu0 0.0
  %255 = vmatprep.subr.mxu0 0.0
  %256 = vmatpush1.msra.mxu0 0.0
  %257 = vmatprep.subr.mxu0 0.0
  %258 = vmatpush1.msra.mxu0 0.0
  %259 = vmatprep.subr.mxu0 0.0
  %260 = vmatpush1.msra.mxu0 0.0
  %261 = vmatprep.subr.mxu0 0.0
  %262 = vmatpush1.msra.mxu0 0.0
  %263 = vmatprep.subr.mxu0 0.0
  %264 = vmatpush1.msra.mxu0 0.0
  %265 = vmatprep.subr.mxu0 0.0
  %266 = vmatpush1.msra.mxu0 0.0
  %267 = vmatprep.subr.mxu0 0.0
  %268 = vmatpush1.msra.mxu0 0.0
  %269 = vmatprep.subr.mxu0 0.0
  %270 = vmatpush1.msra.mxu0 0.0
  %271 = vmatprep.subr.mxu0 0.0
  %272 = vmatpush1.msra.mxu0 0.0
  %273 = vmatprep.subr.mxu0 0.0
  %274 = vmatpush1.msra.mxu0 0.0
  %275 = vmatprep.subr.mxu0 0.0
  %276 = vmatpush1.msra.mxu0 0.0
  %277 = vmatprep.subr.mxu0 0.0
  %278 = vmatpush1.msra.mxu0 0.0
  %279 = vmatprep.subr.mxu0 0.0
  %280 = vmatpush1.msra.mxu0 0.0
  %281 = vmatprep.subr.mxu0 0.0
  %282 = vmatpush1.msra.mxu0 0.0
  %283 = vmatprep.subr.mxu0 0.0
  %284 = vmatpush1.msra.mxu0 0.0
  %285 = vmatprep.subr.mxu0 0.0
  %286 = vmatpush1.msra.mxu0 0.0
  %287 = vmatprep.subr.mxu0 0.0
  %288 = vmatpush1.msra.mxu0 0.0
  %289 = vmatprep.subr.mxu0 0.0
  %290 = vmatpush1.msra.mxu0 0.0
  %291 = vmatprep.subr.mxu0 0.0
  %292 = vmatpush1.msra.mxu0 0.0
  %293 = vmatprep.mubr.f32.mxu0 0.0
  %294 = vmatmul.mubr.f32.gmra.mrb[0].mxu0 %v224
  %v295 = vpop.f32.mrb[0].mxu0
  %v296 = vadd.f32 0.0, %v295
  %v297 = vpop.f32.mrb[0].mxu0
  %298 = vdwg.mxu0
  %v299 = vxor.u32 %v296, 2147483648
  %v300 = vmul.f32 %v299, 1.442695
  %v301 = vpow.pop %v300
  %v302 = vadd.f32 %v301, 1.0
  %v303 = vrcp.pop %v302
  %v304 = vmul.f32 1.0, %v303
  %v305 = vlaneseq
  %v306 = vshrl.u32 %v305, 7
  %v307 = vsub.s32 0, %v306
  %v308 = vrot.slane %v304, %v307
  %310 = vbcast.lane.b32.xlu0 %v308, 256
  %v311 = vpop.permute.xlu0 %310
  %s313 = sor.u32 256, 8
  %314 = vbcast.lane.b32.xlu0 %v308, %s313
  %v315 = vpop.permute.xlu0 %314
  %v316 = vlaneseq
  %v317 = vshrl.u32 %v316, 7
  %v318 = vsub.s32 1, %v317
  %v319 = vrot.slane %v304, %v318
  %321 = vbcast.lane.b32.xlu0 %v319, 256
  %v322 = vpop.permute.xlu0 %321
  %s324 = sor.u32 256, 8
  %325 = vbcast.lane.b32.xlu0 %v319, %s324
  %v326 = vpop.permute.xlu0 %325
  %v327 = vmul.f32 %v17, %v311
  %v328 = vmul.f32 %v18, %v315
  %v329 = vmul.f32 %v19, %v322
  %v330 = vmul.f32 %v20, %v326
  %331 = vst.msk [vmem:[%s4] sm:$0xff] %vm21, %v327
  %332 = vst.msk [vmem:[%s4 + $0x8] sm:$0xff] %vm21, %v328
  %333 = vst.msk [vmem:[%s4 + $0x10] sm:$0xff] %vm21, %v329
  %334 = vst.msk [vmem:[%s4 + $0x18] sm:$0xff] %vm21, %v330
  // Predicated region
  $region18: #{se_block.1} parent=0 // pred_check
    _
  $region19: #{se_block.1} parent=0 // pred_check_branch
    %336 = sbr.rel (0) target = $region21
  $region20: #{se_block.1} parent=0 // pred_region
    _
  $region21: #{se_block.1} parent=0 // pred_fallthru
    _
  // Predicated region
  $region22: #{se_block.1} parent=0 // pred_check
    _
  $region23: #{se_block.1} parent=0 // pred_check_branch
    %338 = sbr.rel (0) target = $region25
  $region24: #{se_block.1} parent=0 // pred_region
    _
  $region25: #{se_block.1} parent=0 // pred_fallthru
    _

</llo_original>
